<compile_context>
chip_gen: v7x
topology: tpu7x:2x2x1
jax: 0.10.0
libtpu: 0.0.40
codegen_flags: <defaults>
</compile_context>

<pallas_src>
import functools

import jax
import jax.numpy as jnp
import numpy as np
from jax.experimental import pallas as pl
from jax.experimental.pallas import tpu as pltpu


def _ceil8(n):
    return ((n + 7) // 8) * 8


def _small_layout(hidden_size):
    """Row offsets inside the packed small-parameter buffer (sublane-aligned)."""
    r_w1 = 8
    r_b1 = r_w1 + _ceil8(hidden_size)
    r_w2 = r_b1 + 8
    r_b2 = r_w2 + 8
    rows = r_b2 + 8
    return r_w1, r_b1, r_w2, r_b2, rows


def _lstm_head_kernel(
    x_ref,      # (T*Bp, D)  f32   time-major, batch-padded, flattened input
    wih_ref,    # (D, 4H)    f32   pre-transposed, gate order [i, f, o, g]
    whh_ref,    # (H, 4H)    bf16  pre-transposed, gate order [i, f, o, g]
    small_ref,  # (rows, W)  f32   packed {fused bias, fc1 W/b, fc2 W/b}
    out_ref,    # (Bp, 1)    f32
    xw_scr,     # (T*Bp, 4H) f32   VMEM scratch for the hoisted input projection
    *,
    hidden_size: int,
    seq_len: int,
    batch_p: int,
    head_pad: int,
    layout: tuple,
):
    H, T, Bp, P = hidden_size, seq_len, batch_p, head_pad
    r_w1, r_b1, r_w2, r_b2, _ = layout

    # ---- hoisted input projection: one matmul for all time steps, staged in
    # VMEM scratch so the recurrence only loads one slab per step.
    xw_scr[...] = (
        jnp.dot(x_ref[...], wih_ref[...], preferred_element_type=jnp.float32)
        + small_ref[0:1, 0:4 * H]
    )

    # ---- recurrence: h/c live in vregs; T is static, loop fully unrolled.
    h = jnp.zeros((Bp, H), jnp.float32)
    c = jnp.zeros((Bp, H), jnp.float32)
    for t in range(T):
        xw_t = xw_scr[t * Bp:(t + 1) * Bp, :]          # aligned leading-axis slab
        # bf16 operands -> single-pass MXU; accumulate in f32.
        gates = xw_t + jnp.dot(
            h.astype(jnp.bfloat16), whh_ref[...],
            preferred_element_type=jnp.float32)
        # gate order [i, f, o, g]: one sigmoid slab, one tanh slab.
        sig = jax.nn.sigmoid(gates[:, :3 * H])
        g_g = jnp.tanh(gates[:, 3 * H:])
        i_g = sig[:, 0:H]
        f_g = sig[:, H:2 * H]
        o_g = sig[:, 2 * H:3 * H]
        c = f_g * c + i_g * g_g
        h = o_g * jnp.tanh(c)

    # ---- head: fc1 (one lane-dense MXU matmul, zero-padded to width P) + ReLU,
    # then fc2 on the VPU/XLU (broadcast multiply + lane reduction).
    w1 = small_ref[r_w1:r_w1 + H, 0:P]                 # (H, P), cols >=8 are zero
    b1 = small_ref[r_b1:r_b1 + 1, 0:P]                 # (1, P)
    w2 = small_ref[r_w2:r_w2 + 1, 0:P]                 # (1, P)
    b2 = small_ref[r_b2:r_b2 + 1, 0:1]                 # (1, 1)

    z1 = jnp.maximum(
        jnp.dot(h, w1, preferred_element_type=jnp.float32) + b1, 0.0)
    z2 = jnp.sum(z1 * w2, axis=-1, keepdims=True) + b2
    out_ref[...] = z2.astype(out_ref.dtype)


def _reorder_gates_rows(w, H):
    """Rows ordered [i, f, g, o] (PyTorch) -> [i, f, o, g]."""
    return jnp.concatenate([w[:2 * H], w[3 * H:4 * H], w[2 * H:3 * H]], axis=0)


def prepare_params(params):
    """One-time weight prep: reorder gates, transpose, fuse biases, pack smalls."""
    H = params["w_hh"].shape[1]                         # w_hh is (4H, H)
    P = 128
    W = max(4 * H, P)
    r_w1, r_b1, r_w2, r_b2, rows = _small_layout(H)

    wih_t = _reorder_gates_rows(params["w_ih"], H).T.astype(jnp.float32)    # (D, 4H)
    whh_t = _reorder_gates_rows(params["w_hh"], H).T.astype(jnp.bfloat16)   # (H, 4H)
    b = _reorder_gates_rows(params["b_ih"] + params["b_hh"], H)             # (4H,)

    small = jnp.zeros((rows, W), jnp.float32)
    small = small.at[0, 0:4 * H].set(b)
    small = small.at[r_w1:r_w1 + H, 0:8].set(params["fc1_w"].T)             # (H, 8)
    small = small.at[r_b1, 0:8].set(params["fc1_b"])
    small = small.at[r_w2, 0:8].set(params["fc2_w"][0])
    small = small.at[r_b2, 0].set(params["fc2_b"][0])

    return {"wih_t": wih_t, "whh": whh_t, "small": small}


@jax.jit
def model_simple_small_forward(x, prep):
    """x: (B, T, D) float32.  prep: output of prepare_params.  Returns (B, 1)."""
    B, T, D = x.shape
    H = prep["whh"].shape[0]
    P = 128
    layout = _small_layout(H)

    # ---- per-call glue: pad batch to a multiple of 8, go time-major, flatten.
    Bp = _ceil8(B)
    x_tm = jnp.swapaxes(x, 0, 1)                        # (T, B, D)
    if Bp != B:
        x_tm = jnp.pad(x_tm, ((0, 0), (0, Bp - B), (0, 0)))
    x2d = x_tm.reshape(T * Bp, D)                       # (T*Bp, D), time outermost

    kernel = functools.partial(
        _lstm_head_kernel,
        hidden_size=H, seq_len=T, batch_p=Bp, head_pad=P, layout=layout)

    vmem = pl.BlockSpec(memory_space=pltpu.MemorySpace.VMEM)
    out_p = pl.pallas_call(
        kernel,
        out_shape=jax.ShapeDtypeStruct((Bp, 1), jnp.float32),
        in_specs=[vmem, vmem, vmem, vmem],
        out_specs=vmem,
        scratch_shapes=[pltpu.VMEM((T * Bp, 4 * H), jnp.float32)],
    )(x2d, prep["wih_t"], prep["whh"], prep["small"])

    return out_p[:B]


def _reference_forward(x, params):
    """Pure-JAX reference matching PyTorch LSTM semantics (eval mode)."""
    B, T, D = x.shape
    H = params["w_hh"].shape[1]
    w_ih, w_hh = params["w_ih"], params["w_hh"]
    b = params["b_ih"] + params["b_hh"]

    def step(carry, x_t):
        h, c = carry
        gates = x_t @ w_ih.T + h @ w_hh.T + b
        i = jax.nn.sigmoid(gates[:, 0 * H:1 * H])
        f = jax.nn.sigmoid(gates[:, 1 * H:2 * H])
        g = jnp.tanh(gates[:, 2 * H:3 * H])
        o = jax.nn.sigmoid(gates[:, 3 * H:4 * H])
        c = f * c + i * g
        h = o * jnp.tanh(c)
        return (h, c), None

    h0 = jnp.zeros((B, H), jnp.float32)
    c0 = jnp.zeros((B, H), jnp.float32)
    (h_T, _), _ = jax.lax.scan(step, (h0, c0), jnp.swapaxes(x, 0, 1))
    z1 = jnp.maximum(h_T @ params["fc1_w"].T + params["fc1_b"], 0.0)
    return z1 @ params["fc2_w"].T + params["fc2_b"]


def init_params(key, input_size, hidden_size):
    """Deterministic init mimicking PyTorch's U(-1/sqrt(H), 1/sqrt(H))."""
    ks = jax.random.split(key, 8)
    s = 1.0 / np.sqrt(hidden_size)
    u = lambda k, shape: jax.random.uniform(k, shape, jnp.float32, -s, s)
    return {
        "w_ih": u(ks[0], (4 * hidden_size, input_size)),
        "w_hh": u(ks[1], (4 * hidden_size, hidden_size)),
        "b_ih": u(ks[2], (4 * hidden_size,)),
        "b_hh": u(ks[3], (4 * hidden_size,)),
        "fc1_w": u(ks[4], (8, hidden_size)),
        "fc1_b": u(ks[5], (8,)),
        "fc2_w": u(ks[6], (1, 8)),
        "fc2_b": u(ks[7], (1,)),
    }


if __name__ == "__main__":
    B, T, D, H = 4, 8, 16, 64   # batch, seq_len, input_size, hidden_size

    key = jax.random.PRNGKey(0)
    k_x, k_p = jax.random.split(key)
    x = jax.random.normal(k_x, (B, T, D), jnp.float32)
    params = init_params(k_p, D, H)

    prep = prepare_params(params)            # one-time weight prep (off hot path)

    out = model_simple_small_forward(x, prep)
    out = jax.block_until_ready(out)

    ref = jax.block_until_ready(_reference_forward(x, params))
    # Slightly loosened tolerance: recurrence matmul operands are bf16 (f32 acc).
    np.testing.assert_allclose(np.asarray(out), np.asarray(ref), rtol=2e-2, atol=2e-2)

    print("KERNEL_OK")
</pallas_src>

<mosaic_0001>
module attributes {stable_mosaic.version = 11 : i64} {
  func.func @_lstm_head_kernel(%arg0: memref<64x16xf32, #tpu.memory_space<vmem>>, %arg1: memref<16x256xf32, #tpu.memory_space<vmem>>, %arg2: memref<64x256xbf16, #tpu.memory_space<vmem>>, %arg3: memref<96x256xf32, #tpu.memory_space<vmem>>, %arg4: memref<8x1xf32, #tpu.memory_space<vmem>>, %arg5: memref<64x256xf32, #tpu.memory_space<vmem>>) attributes {dimension_semantics = [], scalar_prefetch = 0 : i64, scratch_operands = 1 : i64, tpu.core_type = #tpu.core_type<tc>} {
    %c0 = arith.constant 0 : index
    %c0_0 = arith.constant 0 : index
    %0 = vector.load %arg0[%c0, %c0_0] : memref<64x16xf32, #tpu.memory_space<vmem>>, vector<64x16xf32>
    %c0_1 = arith.constant 0 : index
    %c0_2 = arith.constant 0 : index
    %1 = vector.load %arg1[%c0_1, %c0_2] : memref<16x256xf32, #tpu.memory_space<vmem>>, vector<16x256xf32>
    %cst = arith.constant dense<0.000000e+00> : vector<64x256xf32>
    %2 = tpu.matmul %0, %1, %cst {dimension_numbers = #tpu.dot_dimension_numbers<[1], [0], [0], [1], [0, 0, 1, 1], [], []>} : vector<64x16xf32>, vector<16x256xf32>, vector<64x256xf32> -> vector<64x256xf32>
    %c0_3 = arith.constant 0 : index
    %c0_4 = arith.constant 0 : index
    %3 = vector.load %arg3[%c0_3, %c0_4] : memref<96x256xf32, #tpu.memory_space<vmem>>, vector<1x256xf32>
    %4 = vector.broadcast %3 : vector<1x256xf32> to vector<64x256xf32>
    %5 = arith.addf %2, %4 : vector<64x256xf32>
    %c0_5 = arith.constant 0 : index
    %c0_6 = arith.constant 0 : index
    %6 = vector.load %arg5[%c0_5, %c0_6] : memref<64x256xf32, #tpu.memory_space<vmem>>, vector<64x256xf32>
    tpu.vector_store %arg5[%c0_5, %c0_6], %5 {strides = array<i32>} : memref<64x256xf32, #tpu.memory_space<vmem>>, vector<64x256xf32>,
    %cst_7 = arith.constant 0.000000e+00 : f32
    %7 = vector.broadcast %cst_7 : f32 to vector<8x64xf32>
    %cst_8 = arith.constant 0.000000e+00 : f32
    %8 = vector.broadcast %cst_8 : f32 to vector<8x64xf32>
    %c0_9 = arith.constant 0 : index
    %c0_10 = arith.constant 0 : index
    %9 = vector.load %arg5[%c0_9, %c0_10] : memref<64x256xf32, #tpu.memory_space<vmem>>, vector<8x256xf32>
    %10 = arith.truncf %7 : vector<8x64xf32> to vector<8x64xbf16>
    %c0_11 = arith.constant 0 : index
    %c0_12 = arith.constant 0 : index
    %11 = vector.load %arg2[%c0_11, %c0_12] : memref<64x256xbf16, #tpu.memory_space<vmem>>, vector<64x256xbf16>
    %cst_13 = arith.constant dense<0.000000e+00> : vector<8x256xf32>
    %12 = tpu.matmul %10, %11, %cst_13 {dimension_numbers = #tpu.dot_dimension_numbers<[1], [0], [0], [1], [0, 0, 1, 1], [], []>} : vector<8x64xbf16>, vector<64x256xbf16>, vector<8x256xf32> -> vector<8x256xf32>
    %13 = arith.addf %9, %12 : vector<8x256xf32>
    %14 = vector.extract_strided_slice %13 {offsets = [0, 0], sizes = [8, 192], strides = [1, 1]} : vector<8x256xf32> to vector<8x192xf32>
    %15 = arith.negf %14 : vector<8x192xf32>
    %16 = math.exp %15 : vector<8x192xf32>
    %cst_14 = arith.constant 1.000000e+00 : f32
    %17 = vector.broadcast %cst_14 : f32 to vector<8x192xf32>
    %18 = arith.addf %17, %16 : vector<8x192xf32>
    %19 = arith.divf %17, %18 : vector<8x192xf32>
    %20 = vector.extract_strided_slice %13 {offsets = [0, 192], sizes = [8, 64], strides = [1, 1]} : vector<8x256xf32> to vector<8x64xf32>
    %21 = math.tanh %20 : vector<8x64xf32>
    %22 = vector.extract_strided_slice %19 {offsets = [0, 0], sizes = [8, 64], strides = [1, 1]} : vector<8x192xf32> to vector<8x64xf32>
    %23 = vector.extract_strided_slice %19 {offsets = [0, 64], sizes = [8, 64], strides = [1, 1]} : vector<8x192xf32> to vector<8x64xf32>
    %24 = vector.extract_strided_slice %19 {offsets = [0, 128], sizes = [8, 64], strides = [1, 1]} : vector<8x192xf32> to vector<8x64xf32>
    %25 = arith.mulf %23, %8 : vector<8x64xf32>
    %26 = arith.mulf %22, %21 : vector<8x64xf32>
    %27 = arith.addf %25, %26 : vector<8x64xf32>
    %28 = math.tanh %27 : vector<8x64xf32>
    %29 = arith.mulf %24, %28 : vector<8x64xf32>
    %c8 = arith.constant 8 : index
    %c0_15 = arith.constant 0 : index
    %30 = vector.load %arg5[%c8, %c0_15] : memref<64x256xf32, #tpu.memory_space<vmem>>, vector<8x256xf32>
    %31 = arith.truncf %29 : vector<8x64xf32> to vector<8x64xbf16>
    %c0_16 = arith.constant 0 : index
    %c0_17 = arith.constant 0 : index
    %32 = vector.load %arg2[%c0_16, %c0_17] : memref<64x256xbf16, #tpu.memory_space<vmem>>, vector<64x256xbf16>
    %cst_18 = arith.constant dense<0.000000e+00> : vector<8x256xf32>
    %33 = tpu.matmul %31, %32, %cst_18 {dimension_numbers = #tpu.dot_dimension_numbers<[1], [0], [0], [1], [0, 0, 1, 1], [], []>} : vector<8x64xbf16>, vector<64x256xbf16>, vector<8x256xf32> -> vector<8x256xf32>
    %34 = arith.addf %30, %33 : vector<8x256xf32>
    %35 = vector.extract_strided_slice %34 {offsets = [0, 0], sizes = [8, 192], strides = [1, 1]} : vector<8x256xf32> to vector<8x192xf32>
    %36 = arith.negf %35 : vector<8x192xf32>
    %37 = math.exp %36 : vector<8x192xf32>
    %cst_19 = arith.constant 1.000000e+00 : f32
    %38 = vector.broadcast %cst_19 : f32 to vector<8x192xf32>
    %39 = arith.addf %38, %37 : vector<8x192xf32>
    %40 = arith.divf %38, %39 : vector<8x192xf32>
    %41 = vector.extract_strided_slice %34 {offsets = [0, 192], sizes = [8, 64], strides = [1, 1]} : vector<8x256xf32> to vector<8x64xf32>
    %42 = math.tanh %41 : vector<8x64xf32>
    %43 = vector.extract_strided_slice %40 {offsets = [0, 0], sizes = [8, 64], strides = [1, 1]} : vector<8x192xf32> to vector<8x64xf32>
    %44 = vector.extract_strided_slice %40 {offsets = [0, 64], sizes = [8, 64], strides = [1, 1]} : vector<8x192xf32> to vector<8x64xf32>
    %45 = vector.extract_strided_slice %40 {offsets = [0, 128], sizes = [8, 64], strides = [1, 1]} : vector<8x192xf32> to vector<8x64xf32>
    %46 = arith.mulf %44, %27 : vector<8x64xf32>
    %47 = arith.mulf %43, %42 : vector<8x64xf32>
    %48 = arith.addf %46, %47 : vector<8x64xf32>
    %49 = math.tanh %48 : vector<8x64xf32>
    %50 = arith.mulf %45, %49 : vector<8x64xf32>
    %c16 = arith.constant 16 : index
    %c0_20 = arith.constant 0 : index
    %51 = vector.load %arg5[%c16, %c0_20] : memref<64x256xf32, #tpu.memory_space<vmem>>, vector<8x256xf32>
    %52 = arith.truncf %50 : vector<8x64xf32> to vector<8x64xbf16>
    %c0_21 = arith.constant 0 : index
    %c0_22 = arith.constant 0 : index
    %53 = vector.load %arg2[%c0_21, %c0_22] : memref<64x256xbf16, #tpu.memory_space<vmem>>, vector<64x256xbf16>
    %cst_23 = arith.constant dense<0.000000e+00> : vector<8x256xf32>
    %54 = tpu.matmul %52, %53, %cst_23 {dimension_numbers = #tpu.dot_dimension_numbers<[1], [0], [0], [1], [0, 0, 1, 1], [], []>} : vector<8x64xbf16>, vector<64x256xbf16>, vector<8x256xf32> -> vector<8x256xf32>
    %55 = arith.addf %51, %54 : vector<8x256xf32>
    %56 = vector.extract_strided_slice %55 {offsets = [0, 0], sizes = [8, 192], strides = [1, 1]} : vector<8x256xf32> to vector<8x192xf32>
    %57 = arith.negf %56 : vector<8x192xf32>
    %58 = math.exp %57 : vector<8x192xf32>
    %cst_24 = arith.constant 1.000000e+00 : f32
    %59 = vector.broadcast %cst_24 : f32 to vector<8x192xf32>
    %60 = arith.addf %59, %58 : vector<8x192xf32>
    %61 = arith.divf %59, %60 : vector<8x192xf32>
    %62 = vector.extract_strided_slice %55 {offsets = [0, 192], sizes = [8, 64], strides = [1, 1]} : vector<8x256xf32> to vector<8x64xf32>
    %63 = math.tanh %62 : vector<8x64xf32>
    %64 = vector.extract_strided_slice %61 {offsets = [0, 0], sizes = [8, 64], strides = [1, 1]} : vector<8x192xf32> to vector<8x64xf32>
    %65 = vector.extract_strided_slice %61 {offsets = [0, 64], sizes = [8, 64], strides = [1, 1]} : vector<8x192xf32> to vector<8x64xf32>
    %66 = vector.extract_strided_slice %61 {offsets = [0, 128], sizes = [8, 64], strides = [1, 1]} : vector<8x192xf32> to vector<8x64xf32>
    %67 = arith.mulf %65, %48 : vector<8x64xf32>
    %68 = arith.mulf %64, %63 : vector<8x64xf32>
    %69 = arith.addf %67, %68 : vector<8x64xf32>
    %70 = math.tanh %69 : vector<8x64xf32>
    %71 = arith.mulf %66, %70 : vector<8x64xf32>
    %c24 = arith.constant 24 : index
    %c0_25 = arith.constant 0 : index
    %72 = vector.load %arg5[%c24, %c0_25] : memref<64x256xf32, #tpu.memory_space<vmem>>, vector<8x256xf32>
    %73 = arith.truncf %71 : vector<8x64xf32> to vector<8x64xbf16>
    %c0_26 = arith.constant 0 : index
    %c0_27 = arith.constant 0 : index
    %74 = vector.load %arg2[%c0_26, %c0_27] : memref<64x256xbf16, #tpu.memory_space<vmem>>, vector<64x256xbf16>
    %cst_28 = arith.constant dense<0.000000e+00> : vector<8x256xf32>
    %75 = tpu.matmul %73, %74, %cst_28 {dimension_numbers = #tpu.dot_dimension_numbers<[1], [0], [0], [1], [0, 0, 1, 1], [], []>} : vector<8x64xbf16>, vector<64x256xbf16>, vector<8x256xf32> -> vector<8x256xf32>
    %76 = arith.addf %72, %75 : vector<8x256xf32>
    %77 = vector.extract_strided_slice %76 {offsets = [0, 0], sizes = [8, 192], strides = [1, 1]} : vector<8x256xf32> to vector<8x192xf32>
    %78 = arith.negf %77 : vector<8x192xf32>
    %79 = math.exp %78 : vector<8x192xf32>
    %cst_29 = arith.constant 1.000000e+00 : f32
    %80 = vector.broadcast %cst_29 : f32 to vector<8x192xf32>
    %81 = arith.addf %80, %79 : vector<8x192xf32>
    %82 = arith.divf %80, %81 : vector<8x192xf32>
    %83 = vector.extract_strided_slice %76 {offsets = [0, 192], sizes = [8, 64], strides = [1, 1]} : vector<8x256xf32> to vector<8x64xf32>
    %84 = math.tanh %83 : vector<8x64xf32>
    %85 = vector.extract_strided_slice %82 {offsets = [0, 0], sizes = [8, 64], strides = [1, 1]} : vector<8x192xf32> to vector<8x64xf32>
    %86 = vector.extract_strided_slice %82 {offsets = [0, 64], sizes = [8, 64], strides = [1, 1]} : vector<8x192xf32> to vector<8x64xf32>
    %87 = vector.extract_strided_slice %82 {offsets = [0, 128], sizes = [8, 64], strides = [1, 1]} : vector<8x192xf32> to vector<8x64xf32>
    %88 = arith.mulf %86, %69 : vector<8x64xf32>
    %89 = arith.mulf %85, %84 : vector<8x64xf32>
    %90 = arith.addf %88, %89 : vector<8x64xf32>
    %91 = math.tanh %90 : vector<8x64xf32>
    %92 = arith.mulf %87, %91 : vector<8x64xf32>
    %c32 = arith.constant 32 : index
    %c0_30 = arith.constant 0 : index
    %93 = vector.load %arg5[%c32, %c0_30] : memref<64x256xf32, #tpu.memory_space<vmem>>, vector<8x256xf32>
    %94 = arith.truncf %92 : vector<8x64xf32> to vector<8x64xbf16>
    %c0_31 = arith.constant 0 : index
    %c0_32 = arith.constant 0 : index
    %95 = vector.load %arg2[%c0_31, %c0_32] : memref<64x256xbf16, #tpu.memory_space<vmem>>, vector<64x256xbf16>
    %cst_33 = arith.constant dense<0.000000e+00> : vector<8x256xf32>
    %96 = tpu.matmul %94, %95, %cst_33 {dimension_numbers = #tpu.dot_dimension_numbers<[1], [0], [0], [1], [0, 0, 1, 1], [], []>} : vector<8x64xbf16>, vector<64x256xbf16>, vector<8x256xf32> -> vector<8x256xf32>
    %97 = arith.addf %93, %96 : vector<8x256xf32>
    %98 = vector.extract_strided_slice %97 {offsets = [0, 0], sizes = [8, 192], strides = [1, 1]} : vector<8x256xf32> to vector<8x192xf32>
    %99 = arith.negf %98 : vector<8x192xf32>
    %100 = math.exp %99 : vector<8x192xf32>
    %cst_34 = arith.constant 1.000000e+00 : f32
    %101 = vector.broadcast %cst_34 : f32 to vector<8x192xf32>
    %102 = arith.addf %101, %100 : vector<8x192xf32>
    %103 = arith.divf %101, %102 : vector<8x192xf32>
    %104 = vector.extract_strided_slice %97 {offsets = [0, 192], sizes = [8, 64], strides = [1, 1]} : vector<8x256xf32> to vector<8x64xf32>
    %105 = math.tanh %104 : vector<8x64xf32>
    %106 = vector.extract_strided_slice %103 {offsets = [0, 0], sizes = [8, 64], strides = [1, 1]} : vector<8x192xf32> to vector<8x64xf32>
    %107 = vector.extract_strided_slice %103 {offsets = [0, 64], sizes = [8, 64], strides = [1, 1]} : vector<8x192xf32> to vector<8x64xf32>
    %108 = vector.extract_strided_slice %103 {offsets = [0, 128], sizes = [8, 64], strides = [1, 1]} : vector<8x192xf32> to vector<8x64xf32>
    %109 = arith.mulf %107, %90 : vector<8x64xf32>
    %110 = arith.mulf %106, %105 : vector<8x64xf32>
    %111 = arith.addf %109, %110 : vector<8x64xf32>
    %112 = math.tanh %111 : vector<8x64xf32>
    %113 = arith.mulf %108, %112 : vector<8x64xf32>
    %c40 = arith.constant 40 : index
    %c0_35 = arith.constant 0 : index
    %114 = vector.load %arg5[%c40, %c0_35] : memref<64x256xf32, #tpu.memory_space<vmem>>, vector<8x256xf32>
    %115 = arith.truncf %113 : vector<8x64xf32> to vector<8x64xbf16>
    %c0_36 = arith.constant 0 : index
    %c0_37 = arith.constant 0 : index
    %116 = vector.load %arg2[%c0_36, %c0_37] : memref<64x256xbf16, #tpu.memory_space<vmem>>, vector<64x256xbf16>
    %cst_38 = arith.constant dense<0.000000e+00> : vector<8x256xf32>
    %117 = tpu.matmul %115, %116, %cst_38 {dimension_numbers = #tpu.dot_dimension_numbers<[1], [0], [0], [1], [0, 0, 1, 1], [], []>} : vector<8x64xbf16>, vector<64x256xbf16>, vector<8x256xf32> -> vector<8x256xf32>
    %118 = arith.addf %114, %117 : vector<8x256xf32>
    %119 = vector.extract_strided_slice %118 {offsets = [0, 0], sizes = [8, 192], strides = [1, 1]} : vector<8x256xf32> to vector<8x192xf32>
    %120 = arith.negf %119 : vector<8x192xf32>
    %121 = math.exp %120 : vector<8x192xf32>
    %cst_39 = arith.constant 1.000000e+00 : f32
    %122 = vector.broadcast %cst_39 : f32 to vector<8x192xf32>
    %123 = arith.addf %122, %121 : vector<8x192xf32>
    %124 = arith.divf %122, %123 : vector<8x192xf32>
    %125 = vector.extract_strided_slice %118 {offsets = [0, 192], sizes = [8, 64], strides = [1, 1]} : vector<8x256xf32> to vector<8x64xf32>
    %126 = math.tanh %125 : vector<8x64xf32>
    %127 = vector.extract_strided_slice %124 {offsets = [0, 0], sizes = [8, 64], strides = [1, 1]} : vector<8x192xf32> to vector<8x64xf32>
    %128 = vector.extract_strided_slice %124 {offsets = [0, 64], sizes = [8, 64], strides = [1, 1]} : vector<8x192xf32> to vector<8x64xf32>
    %129 = vector.extract_strided_slice %124 {offsets = [0, 128], sizes = [8, 64], strides = [1, 1]} : vector<8x192xf32> to vector<8x64xf32>
    %130 = arith.mulf %128, %111 : vector<8x64xf32>
    %131 = arith.mulf %127, %126 : vector<8x64xf32>
    %132 = arith.addf %130, %131 : vector<8x64xf32>
    %133 = math.tanh %132 : vector<8x64xf32>
    %134 = arith.mulf %129, %133 : vector<8x64xf32>
    %c48 = arith.constant 48 : index
    %c0_40 = arith.constant 0 : index
    %135 = vector.load %arg5[%c48, %c0_40] : memref<64x256xf32, #tpu.memory_space<vmem>>, vector<8x256xf32>
    %136 = arith.truncf %134 : vector<8x64xf32> to vector<8x64xbf16>
    %c0_41 = arith.constant 0 : index
    %c0_42 = arith.constant 0 : index
    %137 = vector.load %arg2[%c0_41, %c0_42] : memref<64x256xbf16, #tpu.memory_space<vmem>>, vector<64x256xbf16>
    %cst_43 = arith.constant dense<0.000000e+00> : vector<8x256xf32>
    %138 = tpu.matmul %136, %137, %cst_43 {dimension_numbers = #tpu.dot_dimension_numbers<[1], [0], [0], [1], [0, 0, 1, 1], [], []>} : vector<8x64xbf16>, vector<64x256xbf16>, vector<8x256xf32> -> vector<8x256xf32>
    %139 = arith.addf %135, %138 : vector<8x256xf32>
    %140 = vector.extract_strided_slice %139 {offsets = [0, 0], sizes = [8, 192], strides = [1, 1]} : vector<8x256xf32> to vector<8x192xf32>
    %141 = arith.negf %140 : vector<8x192xf32>
    %142 = math.exp %141 : vector<8x192xf32>
    %cst_44 = arith.constant 1.000000e+00 : f32
    %143 = vector.broadcast %cst_44 : f32 to vector<8x192xf32>
    %144 = arith.addf %143, %142 : vector<8x192xf32>
    %145 = arith.divf %143, %144 : vector<8x192xf32>
    %146 = vector.extract_strided_slice %139 {offsets = [0, 192], sizes = [8, 64], strides = [1, 1]} : vector<8x256xf32> to vector<8x64xf32>
    %147 = math.tanh %146 : vector<8x64xf32>
    %148 = vector.extract_strided_slice %145 {offsets = [0, 0], sizes = [8, 64], strides = [1, 1]} : vector<8x192xf32> to vector<8x64xf32>
    %149 = vector.extract_strided_slice %145 {offsets = [0, 64], sizes = [8, 64], strides = [1, 1]} : vector<8x192xf32> to vector<8x64xf32>
    %150 = vector.extract_strided_slice %145 {offsets = [0, 128], sizes = [8, 64], strides = [1, 1]} : vector<8x192xf32> to vector<8x64xf32>
    %151 = arith.mulf %149, %132 : vector<8x64xf32>
    %152 = arith.mulf %148, %147 : vector<8x64xf32>
    %153 = arith.addf %151, %152 : vector<8x64xf32>
    %154 = math.tanh %153 : vector<8x64xf32>
    %155 = arith.mulf %150, %154 : vector<8x64xf32>
    %c56 = arith.constant 56 : index
    %c0_45 = arith.constant 0 : index
    %156 = vector.load %arg5[%c56, %c0_45] : memref<64x256xf32, #tpu.memory_space<vmem>>, vector<8x256xf32>
    %157 = arith.truncf %155 : vector<8x64xf32> to vector<8x64xbf16>
    %c0_46 = arith.constant 0 : index
    %c0_47 = arith.constant 0 : index
    %158 = vector.load %arg2[%c0_46, %c0_47] : memref<64x256xbf16, #tpu.memory_space<vmem>>, vector<64x256xbf16>
    %cst_48 = arith.constant dense<0.000000e+00> : vector<8x256xf32>
    %159 = tpu.matmul %157, %158, %cst_48 {dimension_numbers = #tpu.dot_dimension_numbers<[1], [0], [0], [1], [0, 0, 1, 1], [], []>} : vector<8x64xbf16>, vector<64x256xbf16>, vector<8x256xf32> -> vector<8x256xf32>
    %160 = arith.addf %156, %159 : vector<8x256xf32>
    %161 = vector.extract_strided_slice %160 {offsets = [0, 0], sizes = [8, 192], strides = [1, 1]} : vector<8x256xf32> to vector<8x192xf32>
    %162 = arith.negf %161 : vector<8x192xf32>
    %163 = math.exp %162 : vector<8x192xf32>
    %cst_49 = arith.constant 1.000000e+00 : f32
    %164 = vector.broadcast %cst_49 : f32 to vector<8x192xf32>
    %165 = arith.addf %164, %163 : vector<8x192xf32>
    %166 = arith.divf %164, %165 : vector<8x192xf32>
    %167 = vector.extract_strided_slice %160 {offsets = [0, 192], sizes = [8, 64], strides = [1, 1]} : vector<8x256xf32> to vector<8x64xf32>
    %168 = math.tanh %167 : vector<8x64xf32>
    %169 = vector.extract_strided_slice %166 {offsets = [0, 0], sizes = [8, 64], strides = [1, 1]} : vector<8x192xf32> to vector<8x64xf32>
    %170 = vector.extract_strided_slice %166 {offsets = [0, 64], sizes = [8, 64], strides = [1, 1]} : vector<8x192xf32> to vector<8x64xf32>
    %171 = vector.extract_strided_slice %166 {offsets = [0, 128], sizes = [8, 64], strides = [1, 1]} : vector<8x192xf32> to vector<8x64xf32>
    %172 = arith.mulf %170, %153 : vector<8x64xf32>
    %173 = arith.mulf %169, %168 : vector<8x64xf32>
    %174 = arith.addf %172, %173 : vector<8x64xf32>
    %175 = math.tanh %174 : vector<8x64xf32>
    %176 = arith.mulf %171, %175 : vector<8x64xf32>
    %c8_50 = arith.constant 8 : index
    %c0_51 = arith.constant 0 : index
    %177 = vector.load %arg3[%c8_50, %c0_51] : memref<96x256xf32, #tpu.memory_space<vmem>>, vector<64x128xf32>
    %c72 = arith.constant 72 : index
    %c0_52 = arith.constant 0 : index
    %178 = vector.load %arg3[%c72, %c0_52] : memref<96x256xf32, #tpu.memory_space<vmem>>, vector<1x128xf32>
    %c80 = arith.constant 80 : index
    %c0_53 = arith.constant 0 : index
    %179 = vector.load %arg3[%c80, %c0_53] : memref<96x256xf32, #tpu.memory_space<vmem>>, vector<1x128xf32>
    %c88 = arith.constant 88 : index
    %c0_54 = arith.constant 0 : index
    %180 = vector.load %arg3[%c88, %c0_54] : memref<96x256xf32, #tpu.memory_space<vmem>>, vector<1x1xf32>
    %cst_55 = arith.constant dense<0.000000e+00> : vector<8x128xf32>
    %181 = tpu.matmul %176, %177, %cst_55 {dimension_numbers = #tpu.dot_dimension_numbers<[1], [0], [0], [1], [0, 0, 1, 1], [], []>} : vector<8x64xf32>, vector<64x128xf32>, vector<8x128xf32> -> vector<8x128xf32>
    %182 = vector.broadcast %178 : vector<1x128xf32> to vector<8x128xf32>
    %183 = arith.addf %181, %182 : vector<8x128xf32>
    %cst_56 = arith.constant 0.000000e+00 : f32
    %184 = vector.broadcast %cst_56 : f32 to vector<8x128xf32>
    %185 = arith.maximumf %183, %184 : vector<8x128xf32>
    %186 = vector.broadcast %179 : vector<1x128xf32> to vector<8x128xf32>
    %187 = arith.mulf %185, %186 : vector<8x128xf32>
    %cst_57 = arith.constant dense<0.000000e+00> : vector<8xf32>
    %188 = vector.multi_reduction <add>, %187, %cst_57 [1] : vector<8x128xf32> to vector<8xf32>
    %189 = vector.shape_cast %188 : vector<8xf32> to vector<8x1xf32>
    %190 = vector.broadcast %180 : vector<1x1xf32> to vector<8x1xf32>
    %191 = arith.addf %189, %190 : vector<8x1xf32>
    %c0_58 = arith.constant 0 : index
    %c0_59 = arith.constant 0 : index
    %192 = vector.load %arg4[%c0_58, %c0_59] : memref<8x1xf32, #tpu.memory_space<vmem>>, vector<8x1xf32>
    tpu.vector_store %arg4[%c0_58, %c0_59], %191 {strides = array<i32>} : memref<8x1xf32, #tpu.memory_space<vmem>>, vector<8x1xf32>,
    return
  }
}

</mosaic_0001>

<llo_original>
// kernel: model_simple_small_forward.1
$region0: #{model_simple_small_forward.1}
  #allocation0 [shape = 'u32[]', space=smem, size = 0x4, offset = 0x4, fixed_abs, tag = 'smem constant byte address 0x4 - core index']
  #allocation1 [shape = 'u32[144,128]{1,0:T(1,128)}', space=vmem, size = 0x12000, scoped, tag = 'internal scratch']
  #allocation2 [shape = 'f32[64,256]{1,0:T(8,128)}', space=vmem, size = 0x10000, scoped, tag = 'scratch operand']
  %s0 = inlined_call_operand.vmem [shape: f32[64,16], index: 0, kind: input, shape index: {}]
  %s1 = inlined_call_operand.vmem [shape: f32[16,256], index: 1, kind: input, shape index: {}]
  %s2 = inlined_call_operand.vmem [shape: bf16[64,256], index: 2, kind: input, shape index: {}]
  %s3 = inlined_call_operand.hbm [shape: f32[96,256], index: 3, kind: input, shape index: {}]
  %s4 = inlined_call_operand.vmem [shape: f32[8,1], index: 4, kind: output, shape index: {}]
  %s5 = sld [smem:[#allocation0]]
  $region30: #{model_simple_small_forward.1} parent=0
    _
  %s7 = ssub.s32 1, %s5
  %s8 = scalar_select 0, %s7, %s5
  $region1: #{model_simple_small_forward.1} parent=0
    #allocation3 [shape = 'u8[98304]{0}', space=vmem, size = 0x18000, scoped, tag = 'input window, operand 3, single buffered']
    #allocation4 [shape = 's32[1]{0}', space=sflag, size = 0x4, scoped, tag = 'scoped memory for model_simple_small_forward.1']
    %9 = vsyncpa [#allocation4], 0
    // Predicated region
    $region2: #{model_simple_small_forward.1} parent=1 // pred_check
      _
    $region3: #{model_simple_small_forward.1} parent=1 // pred_check_branch
      %11 = sbr.rel (0) target = $region5
    $region4: #{model_simple_small_forward.1} parent=1 // pred_region
      _
    $region5: #{model_simple_small_forward.1} parent=1 // pred_fallthru
      _
    // Predicated region
    $region6: #{model_simple_small_forward.1} parent=1 // pred_check
      _
    $region7: #{model_simple_small_forward.1} parent=1 // pred_check_branch
      %13 = sbr.rel (0) target = $region9
    $region8: #{model_simple_small_forward.1} parent=1 // pred_region
      _
    $region9: #{model_simple_small_forward.1} parent=1 // pred_fallthru
      _
    // Predicated region
    $region10: #{model_simple_small_forward.1} parent=1 // pred_check
      _
    $region11: #{model_simple_small_forward.1} parent=1 // pred_check_branch
      %15 = sbr.rel (0) target = $region13
    $region12: #{model_simple_small_forward.1} parent=1 // pred_region
      _
    $region13: #{model_simple_small_forward.1} parent=1 // pred_fallthru
      _
    // Predicated region
    $region14: #{model_simple_small_forward.1} parent=1 // pred_check
      _
    $region15: #{model_simple_small_forward.1} parent=1 // pred_check_branch
      %17 = sbr.rel (0) target = $region17
    $region16: #{model_simple_small_forward.1} parent=1 // pred_region
      %s19 = ssub.s32 3072, 3072
      %20 = vsyncadd [#allocation4], %s19
      %s21 = sshll.u32 [#allocation3], 4
      %s22 = int_to_ptr.vmem [resolvable:$true] %s21
      %27 = dma.hbm_to_vmem [thread:$0]  %s3, 3072, %s22, [#allocation4], 256, 256, 16
    $region17: #{model_simple_small_forward.1} parent=1 // pred_fallthru
      _
    // Predicated region
    $region18: #{model_simple_small_forward.1} parent=1 // pred_check
      _
    $region19: #{model_simple_small_forward.1} parent=1 // pred_check_branch
      %29 = sbr.rel (0) target = $region21
    $region20: #{model_simple_small_forward.1} parent=1 // pred_region
      %30 = dma.done [#allocation4], 3072
    $region21: #{model_simple_small_forward.1} parent=1 // pred_fallthru
      _
    %v32 = vld [vmem:[%s0] sm:$0xff]
    %v33 = vld [vmem:[%s0 + $0x8] sm:$0xff]
    %v34 = vld [vmem:[%s0 + $0x10] sm:$0xff]
    %v35 = vld [vmem:[%s0 + $0x18] sm:$0xff]
    %v36 = vld [vmem:[%s0 + $0x20] sm:$0xff]
    %v37 = vld [vmem:[%s0 + $0x28] sm:$0xff]
    %v38 = vld [vmem:[%s0 + $0x30] sm:$0xff]
    %v39 = vld [vmem:[%s0 + $0x38] sm:$0xff]
    %v40 = vld [vmem:[%s1] sm:$0xff]
    %v41 = vld [vmem:[%s1 + $0x8] sm:$0xff]
    %v42 = vld [vmem:[%s1 + $0x10] sm:$0xff]
    %v43 = vld [vmem:[%s1 + $0x18] sm:$0xff]
    %v44 = vld [vmem:[#allocation3] ss:$8 sm:$0x3]
    %v46 = vlaneseq
    %v47 = vshrl.u32 %v46, 7
    %v48 = vsub.s32 0, %v47
    %v49 = vrot.slane %v44, %v48
    %v50 = vlaneseq
    %v51 = vshrl.u32 %v50, 7
    %v52 = vsub.s32 1, %v51
    %v53 = vrot.slane %v44, %v52
    %vm56 = vcmask 130048
    %v58 = vsel %vm56, %v32, 0
    %v61 = vsel %vm56, %v33, 0
    %v64 = vsel %vm56, %v34, 0
    %v67 = vsel %vm56, %v35, 0
    %v70 = vsel %vm56, %v36, 0
    %v73 = vsel %vm56, %v37, 0
    %v76 = vsel %vm56, %v38, 0
    %v79 = vsel %vm56, %v39, 0
    %81 = vmatprep.subr.mxu0 %v41
    %82 = vmatpush1.msra.mxu0 %v40
    %83 = vmatprep.subr.mxu0 %v43
    %84 = vmatpush1.msra.mxu0 %v42
    %85 = vmatprep.subr.mxu0 0.0
    %86 = vmatpush1.msra.mxu0 0.0
    %87 = vmatprep.subr.mxu0 0.0
    %88 = vmatpush1.msra.mxu0 0.0
    %89 = vmatprep.subr.mxu0 0.0
    %90 = vmatpush1.msra.mxu0 0.0
    %91 = vmatprep.subr.mxu0 0.0
    %92 = vmatpush1.msra.mxu0 0.0
    %93 = vmatprep.subr.mxu0 0.0
    %94 = vmatpush1.msra.mxu0 0.0
    %95 = vmatprep.subr.mxu0 0.0
    %96 = vmatpush1.msra.mxu0 0.0
    %97 = vmatprep.subr.mxu0 0.0
    %98 = vmatpush1.msra.mxu0 0.0
    %99 = vmatprep.subr.mxu0 0.0
    %100 = vmatpush1.msra.mxu0 0.0
    %101 = vmatprep.subr.mxu0 0.0
    %102 = vmatpush1.msra.mxu0 0.0
    %103 = vmatprep.subr.mxu0 0.0
    %104 = vmatpush1.msra.mxu0 0.0
    %105 = vmatprep.subr.mxu0 0.0
    %106 = vmatpush1.msra.mxu0 0.0
    %107 = vmatprep.subr.mxu0 0.0
    %108 = vmatpush1.msra.mxu0 0.0
    %109 = vmatprep.subr.mxu0 0.0
    %110 = vmatpush1.msra.mxu0 0.0
    %111 = vmatprep.subr.mxu0 0.0
    %112 = vmatpush1.msra.mxu0 0.0
    %113 = vmatprep.subr.mxu0 0.0
    %114 = vmatpush1.msra.mxu0 0.0
    %115 = vmatprep.subr.mxu0 0.0
    %116 = vmatpush1.msra.mxu0 0.0
    %117 = vmatprep.subr.mxu0 0.0
    %118 = vmatpush1.msra.mxu0 0.0
    %119 = vmatprep.subr.mxu0 0.0
    %120 = vmatpush1.msra.mxu0 0.0
    %121 = vmatprep.subr.mxu0 0.0
    %122 = vmatpush1.msra.mxu0 0.0
    %123 = vmatprep.subr.mxu0 0.0
    %124 = vmatpush1.msra.mxu0 0.0
    %125 = vmatprep.subr.mxu0 0.0
    %126 = vmatpush1.msra.mxu0 0.0
    %127 = vmatprep.subr.mxu0 0.0
    %128 = vmatpush1.msra.mxu0 0.0
    %129 = vmatprep.subr.mxu0 0.0
    %130 = vmatpush1.msra.mxu0 0.0
    %131 = vmatprep.subr.mxu0 0.0
    %132 = vmatpush1.msra.mxu0 0.0
    %133 = vmatprep.subr.mxu0 0.0
    %134 = vmatpush1.msra.mxu0 0.0
    %135 = vmatprep.subr.mxu0 0.0
    %136 = vmatpush1.msra.mxu0 0.0
    %137 = vmatprep.subr.mxu0 0.0
    %138 = vmatpush1.msra.mxu0 0.0
    %139 = vmatprep.subr.mxu0 0.0
    %140 = vmatpush1.msra.mxu0 0.0
    %141 = vmatprep.subr.mxu0 0.0
    %142 = vmatpush1.msra.mxu0 0.0
    %143 = vmatprep.subr.mxu0 0.0
    %144 = vmatpush1.msra.mxu0 0.0
    %145 = vmatprep.mubr.f32.mxu0 0.0
    %146 = vmatmul.mubr.f32.gmra.mrb[0].mxu0 %v58
    %v147 = vpop.f32.mrb[0].mxu0
    %v148 = vadd.f32 %v49, %v147
    %v149 = vpop.f32.mrb[0].mxu0
    %v150 = vadd.f32 %v53, %v149
    %151 = vmatprep.mubr.f32.mxu0 0.0
    %152 = vmatmul.mubr.f32.gmra.mrb[0].mxu0 %v61
    %v153 = vpop.f32.mrb[0].mxu0
    %v154 = vadd.f32 %v49, %v153
    %v155 = vpop.f32.mrb[0].mxu0
    %v156 = vadd.f32 %v53, %v155
    %157 = vmatprep.mubr.f32.mxu0 0.0
    %158 = vmatmul.mubr.f32.gmra.mrb[0].mxu0 %v64
    %v159 = vpop.f32.mrb[0].mxu0
    %v160 = vadd.f32 %v49, %v159
    %v161 = vpop.f32.mrb[0].mxu0
    %v162 = vadd.f32 %v53, %v161
    %163 = vmatprep.mubr.f32.mxu0 0.0
    %164 = vmatmul.mubr.f32.gmra.mrb[0].mxu0 %v67
    %v165 = vpop.f32.mrb[0].mxu0
    %v166 = vadd.f32 %v49, %v165
    %v167 = vpop.f32.mrb[0].mxu0
    %v168 = vadd.f32 %v53, %v167
    %169 = vmatprep.mubr.f32.mxu0 0.0
    %170 = vmatmul.mubr.f32.gmra.mrb[0].mxu0 %v70
    %v171 = vpop.f32.mrb[0].mxu0
    %v172 = vadd.f32 %v49, %v171
    %v173 = vpop.f32.mrb[0].mxu0
    %v174 = vadd.f32 %v53, %v173
    %175 = vmatprep.mubr.f32.mxu0 0.0
    %176 = vmatmul.mubr.f32.gmra.mrb[0].mxu0 %v73
    %v177 = vpop.f32.mrb[0].mxu0
    %v178 = vadd.f32 %v49, %v177
    %v179 = vpop.f32.mrb[0].mxu0
    %v180 = vadd.f32 %v53, %v179
    %181 = vmatprep.mubr.f32.mxu0 0.0
    %182 = vmatmul.mubr.f32.gmra.mrb[0].mxu0 %v76
    %v183 = vpop.f32.mrb[0].mxu0
    %v184 = vadd.f32 %v49, %v183
    %v185 = vpop.f32.mrb[0].mxu0
    %v186 = vadd.f32 %v53, %v185
    %187 = vmatprep.mubr.f32.mxu0 0.0
    %188 = vmatmul.mubr.f32.gmra.mrb[0].mxu0 %v79
    %v189 = vpop.f32.mrb[0].mxu0
    %v190 = vadd.f32 %v49, %v189
    %v191 = vpop.f32.mrb[0].mxu0
    %v192 = vadd.f32 %v53, %v191
    %193 = vdwg.mxu0
    %194 = vst [vmem:[#allocation2] sm:$0xff] %v148
    %195 = vst [vmem:[#allocation2 + $0x8] sm:$0xff] %v150
    %196 = vst [vmem:[#allocation2 + $0x10] sm:$0xff] %v154
    %197 = vst [vmem:[#allocation2 + $0x18] sm:$0xff] %v156
    %198 = vst [vmem:[#allocation2 + $0x20] sm:$0xff] %v160
    %199 = vst [vmem:[#allocation2 + $0x28] sm:$0xff] %v162
    %200 = vst [vmem:[#allocation2 + $0x30] sm:$0xff] %v166
    %201 = vst [vmem:[#allocation2 + $0x38] sm:$0xff] %v168
    %202 = vst [vmem:[#allocation2 + $0x40] sm:$0xff] %v172
    %203 = vst [vmem:[#allocation2 + $0x48] sm:$0xff] %v174
    %204 = vst [vmem:[#allocation2 + $0x50] sm:$0xff] %v178
    %205 = vst [vmem:[#allocation2 + $0x58] sm:$0xff] %v180
    %206 = vst [vmem:[#allocation2 + $0x60] sm:$0xff] %v184
    %207 = vst [vmem:[#allocation2 + $0x68] sm:$0xff] %v186
    %208 = vst [vmem:[#allocation2 + $0x70] sm:$0xff] %v190
    %209 = vst [vmem:[#allocation2 + $0x78] sm:$0xff] %v192
    %v210 = vld [vmem:[#allocation2] sm:$0xff]
    %v211 = vld [vmem:[#allocation2 + $0x8] sm:$0xff]
    %v212 = vld [vmem:[%s2] sm:$0xff]
    %v213 = vld [vmem:[%s2 + $0x8] sm:$0xff]
    %v214 = vld [vmem:[%s2 + $0x10] sm:$0xff]
    %v215 = vld [vmem:[%s2 + $0x18] sm:$0xff]
    %v216 = vld [vmem:[%s2 + $0x20] sm:$0xff]
    %v217 = vld [vmem:[%s2 + $0x28] sm:$0xff]
    %v218 = vld [vmem:[%s2 + $0x30] sm:$0xff]
    %v219 = vld [vmem:[%s2 + $0x38] sm:$0xff]
    %v228 = vunpack.c.l.b16 %v212
    %v229 = vunpack.c.h.b16 %v212
    %v230 = vunpack.c.l.b16 %v213
    %v231 = vunpack.c.h.b16 %v213
    %v232 = vunpack.c.l.b16 %v214
    %v233 = vunpack.c.h.b16 %v214
    %v234 = vunpack.c.l.b16 %v215
    %v235 = vunpack.c.h.b16 %v215
    %v236 = vunpack.c.l.b16 %v216
    %v237 = vunpack.c.h.b16 %v216
    %v238 = vunpack.c.l.b16 %v217
    %v239 = vunpack.c.h.b16 %v217
    %v240 = vunpack.c.l.b16 %v218
    %v241 = vunpack.c.h.b16 %v218
    %v242 = vunpack.c.l.b16 %v219
    %v243 = vunpack.c.h.b16 %v219
    %v244 = vpack.c.b16 %v230, %v228
    %v245 = vpack.c.b16 %v231, %v229
    %v246 = vpack.c.b16 %v234, %v232
    %v247 = vpack.c.b16 %v235, %v233
    %v248 = vpack.c.b16 %v238, %v236
    %v249 = vpack.c.b16 %v239, %v237
    %v250 = vpack.c.b16 %v242, %v240
    %v251 = vpack.c.b16 %v243, %v241
    %vm260 = vcmask 523264
    %v262 = vsel %vm260, 0, 0
    %264 = vmatprep.subr.bf16.mxu0 %v245
    %265 = vmatpush1.bf16.msra.mxu0 %v244
    %266 = vmatprep.subr.bf16.mxu0 %v247
    %267 = vmatpush1.bf16.msra.mxu0 %v246
    %268 = vmatprep.subr.bf16.mxu0 %v249
    %269 = vmatpush1.bf16.msra.mxu0 %v248
    %270 = vmatprep.subr.bf16.mxu0 %v251
    %271 = vmatpush1.bf16.msra.mxu0 %v250
    %272 = vmatprep.subr.bf16.mxu0 0
    %273 = vmatpush1.bf16.msra.mxu0 0
    %274 = vmatprep.subr.bf16.mxu0 0
    %275 = vmatpush1.bf16.msra.mxu0 0
    %276 = vmatprep.subr.bf16.mxu0 0
    %277 = vmatpush1.bf16.msra.mxu0 0
    %278 = vmatprep.subr.bf16.mxu0 0
    %279 = vmatpush1.bf16.msra.mxu0 0
    %280 = vmatprep.subr.bf16.mxu0 0
    %281 = vmatpush1.bf16.msra.mxu0 0
    %282 = vmatprep.subr.bf16.mxu0 0
    %283 = vmatpush1.bf16.msra.mxu0 0
    %284 = vmatprep.subr.bf16.mxu0 0
    %285 = vmatpush1.bf16.msra.mxu0 0
    %286 = vmatprep.subr.bf16.mxu0 0
    %287 = vmatpush1.bf16.msra.mxu0 0
    %288 = vmatprep.subr.bf16.mxu0 0
    %289 = vmatpush1.bf16.msra.mxu0 0
    %290 = vmatprep.subr.bf16.mxu0 0
    %291 = vmatpush1.bf16.msra.mxu0 0
    %292 = vmatprep.subr.bf16.mxu0 0
    %293 = vmatpush1.bf16.msra.mxu0 0
    %294 = vmatprep.subr.bf16.mxu0 0
    %295 = vmatpush1.bf16.msra.mxu0 0
    %296 = vmatprep.mubr.bf16.mxu0 0
    %297 = vmatmul.mubr.bf16.gmra.mrb[0].mxu0 %v262
    %v298 = vpop.f32.mrb[0].mxu0
    %v299 = vadd.f32 0.0, %v298
    %v300 = vpop.f32.mrb[0].mxu0
    %v301 = vadd.f32 0.0, %v300
    %v302 = vpop.f32.mrb[0].mxu0
    %v303 = vpop.f32.mrb[0].mxu0
    %304 = vdwg.mxu0
    %v305 = vadd.f32 %v210, %v299
    %v306 = vadd.f32 %v211, %v301
    %v307 = vxor.u32 %v305, 2147483648
    %v308 = vxor.u32 %v306, 2147483648
    %v309 = vmul.f32 %v307, 1.442695
    %v310 = vpow.pop %v309
    %v311 = vmul.f32 %v308, 1.442695
    %v312 = vpow.pop %v311
    %v313 = vadd.f32 %v310, 1.0
    %v314 = vadd.f32 %v312, 1.0
    %v315 = vrcp.pop %v313
    %v316 = vmul.f32 1.0, %v315
    %v317 = vrcp.pop %v314
    %v318 = vmul.f32 1.0, %v317
    %v319 = vtanh.pop %v306
    %v320 = vmul.f32 %v316, 0.0
    %322 = vrot.lane.b32.xlu0 %v319, 64
    %v323 = vpop.permute.xlu0 %322
    %v325 = vmul.f32 %v316, %v323
    %327 = vrot.lane.b32.xlu0 %v325, 64
    %v328 = vpop.permute.xlu0 %327
    %v330 = vadd.f32 %v320, %v328
    %v331 = vtanh.pop %v330
    %333 = vrot.lane.b32.xlu0 %v331, 64
    %v334 = vpop.permute.xlu0 %333
    %v336 = vmul.f32 %v318, %v334
    %v337 = vld [vmem:[#allocation2 + $0x10] sm:$0xff]
    %v338 = vld [vmem:[#allocation2 + $0x18] sm:$0xff]
    %v339 = vpack.c.bf16 %v336, %v336
    %v341 = vsel %vm260, %v339, 0
    %343 = vmatprep.subr.bf16.mxu0 %v245
    %344 = vmatpush1.bf16.msra.mxu0 %v244
    %345 = vmatprep.subr.bf16.mxu0 %v247
    %346 = vmatpush1.bf16.msra.mxu0 %v246
    %347 = vmatprep.subr.bf16.mxu0 %v249
    %348 = vmatpush1.bf16.msra.mxu0 %v248
    %349 = vmatprep.subr.bf16.mxu0 %v251
    %350 = vmatpush1.bf16.msra.mxu0 %v250
    %351 = vmatprep.subr.bf16.mxu0 0
    %352 = vmatpush1.bf16.msra.mxu0 0
    %353 = vmatprep.subr.bf16.mxu0 0
    %354 = vmatpush1.bf16.msra.mxu0 0
    %355 = vmatprep.subr.bf16.mxu0 0
    %356 = vmatpush1.bf16.msra.mxu0 0
    %357 = vmatprep.subr.bf16.mxu0 0
    %358 = vmatpush1.bf16.msra.mxu0 0
    %359 = vmatprep.subr.bf16.mxu0 0
    %360 = vmatpush1.bf16.msra.mxu0 0
    %361 = vmatprep.subr.bf16.mxu0 0
    %362 = vmatpush1.bf16.msra.mxu0 0
    %363 = vmatprep.subr.bf16.mxu0 0
    %364 = vmatpush1.bf16.msra.mxu0 0
    %365 = vmatprep.subr.bf16.mxu0 0
    %366 = vmatpush1.bf16.msra.mxu0 0
    %367 = vmatprep.subr.bf16.mxu0 0
    %368 = vmatpush1.bf16.msra.mxu0 0
    %369 = vmatprep.subr.bf16.mxu0 0
    %370 = vmatpush1.bf16.msra.mxu0 0
    %371 = vmatprep.subr.bf16.mxu0 0
    %372 = vmatpush1.bf16.msra.mxu0 0
    %373 = vmatprep.subr.bf16.mxu0 0
    %374 = vmatpush1.bf16.msra.mxu0 0
    %375 = vmatprep.mubr.bf16.mxu0 0
    %376 = vmatmul.mubr.bf16.gmra.mrb[0].mxu0 %v341
    %v377 = vpop.f32.mrb[0].mxu0
    %v378 = vadd.f32 0.0, %v377
    %v379 = vpop.f32.mrb[0].mxu0
    %v380 = vadd.f32 0.0, %v379
    %v381 = vpop.f32.mrb[0].mxu0
    %v382 = vpop.f32.mrb[0].mxu0
    %383 = vdwg.mxu0
    %v384 = vadd.f32 %v337, %v378
    %v385 = vadd.f32 %v338, %v380
    %v386 = vxor.u32 %v384, 2147483648
    %v387 = vxor.u32 %v385, 2147483648
    %v388 = vmul.f32 %v386, 1.442695
    %v389 = vpow.pop %v388
    %v390 = vmul.f32 %v387, 1.442695
    %v391 = vpow.pop %v390
    %v392 = vadd.f32 %v389, 1.0
    %v393 = vadd.f32 %v391, 1.0
    %v394 = vrcp.pop %v392
    %v395 = vmul.f32 1.0, %v394
    %v396 = vrcp.pop %v393
    %v397 = vmul.f32 1.0, %v396
    %v398 = vtanh.pop %v385
    %v399 = vmul.f32 %v395, %v330
    %401 = vrot.lane.b32.xlu0 %v398, 64
    %v402 = vpop.permute.xlu0 %401
    %v404 = vmul.f32 %v395, %v402
    %406 = vrot.lane.b32.xlu0 %v404, 64
    %v407 = vpop.permute.xlu0 %406
    %v409 = vadd.f32 %v399, %v407
    %v410 = vtanh.pop %v409
    %412 = vrot.lane.b32.xlu0 %v410, 64
    %v413 = vpop.permute.xlu0 %412
    %v415 = vmul.f32 %v397, %v413
    %v416 = vld [vmem:[#allocation2 + $0x20] sm:$0xff]
    %v417 = vld [vmem:[#allocation2 + $0x28] sm:$0xff]
    %v418 = vpack.c.bf16 %v415, %v415
    %v420 = vsel %vm260, %v418, 0
    %422 = vmatprep.subr.bf16.mxu0 %v245
    %423 = vmatpush1.bf16.msra.mxu0 %v244
    %424 = vmatprep.subr.bf16.mxu0 %v247
    %425 = vmatpush1.bf16.msra.mxu0 %v246
    %426 = vmatprep.subr.bf16.mxu0 %v249
    %427 = vmatpush1.bf16.msra.mxu0 %v248
    %428 = vmatprep.subr.bf16.mxu0 %v251
    %429 = vmatpush1.bf16.msra.mxu0 %v250
    %430 = vmatprep.subr.bf16.mxu0 0
    %431 = vmatpush1.bf16.msra.mxu0 0
    %432 = vmatprep.subr.bf16.mxu0 0
    %433 = vmatpush1.bf16.msra.mxu0 0
    %434 = vmatprep.subr.bf16.mxu0 0
    %435 = vmatpush1.bf16.msra.mxu0 0
    %436 = vmatprep.subr.bf16.mxu0 0
    %437 = vmatpush1.bf16.msra.mxu0 0
    %438 = vmatprep.subr.bf16.mxu0 0
    %439 = vmatpush1.bf16.msra.mxu0 0
    %440 = vmatprep.subr.bf16.mxu0 0
    %441 = vmatpush1.bf16.msra.mxu0 0
    %442 = vmatprep.subr.bf16.mxu0 0
    %443 = vmatpush1.bf16.msra.mxu0 0
    %444 = vmatprep.subr.bf16.mxu0 0
    %445 = vmatpush1.bf16.msra.mxu0 0
    %446 = vmatprep.subr.bf16.mxu0 0
    %447 = vmatpush1.bf16.msra.mxu0 0
    %448 = vmatprep.subr.bf16.mxu0 0
    %449 = vmatpush1.bf16.msra.mxu0 0
    %450 = vmatprep.subr.bf16.mxu0 0
    %451 = vmatpush1.bf16.msra.mxu0 0
    %452 = vmatprep.subr.bf16.mxu0 0
    %453 = vmatpush1.bf16.msra.mxu0 0
    %454 = vmatprep.mubr.bf16.mxu0 0
    %455 = vmatmul.mubr.bf16.gmra.mrb[0].mxu0 %v420
    %v456 = vpop.f32.mrb[0].mxu0
    %v457 = vadd.f32 0.0, %v456
    %v458 = vpop.f32.mrb[0].mxu0
    %v459 = vadd.f32 0.0, %v458
    %v460 = vpop.f32.mrb[0].mxu0
    %v461 = vpop.f32.mrb[0].mxu0
    %462 = vdwg.mxu0
    %v463 = vadd.f32 %v416, %v457
    %v464 = vadd.f32 %v417, %v459
    %v465 = vxor.u32 %v463, 2147483648
    %v466 = vxor.u32 %v464, 2147483648
    %v467 = vmul.f32 %v465, 1.442695
    %v468 = vpow.pop %v467
    %v469 = vmul.f32 %v466, 1.442695
    %v470 = vpow.pop %v469
    %v471 = vadd.f32 %v468, 1.0
    %v472 = vadd.f32 %v470, 1.0
    %v473 = vrcp.pop %v471
    %v474 = vmul.f32 1.0, %v473
    %v475 = vrcp.pop %v472
    %v476 = vmul.f32 1.0, %v475
    %v477 = vtanh.pop %v464
    %v478 = vmul.f32 %v474, %v409
    %480 = vrot.lane.b32.xlu0 %v477, 64
    %v481 = vpop.permute.xlu0 %480
    %v483 = vmul.f32 %v474, %v481
    %485 = vrot.lane.b32.xlu0 %v483, 64
    %v486 = vpop.permute.xlu0 %485
    %v488 = vadd.f32 %v478, %v486
    %v489 = vtanh.pop %v488
    %491 = vrot.lane.b32.xlu0 %v489, 64
    %v492 = vpop.permute.xlu0 %491
    %v494 = vmul.f32 %v476, %v492
    %v495 = vld [vmem:[#allocation2 + $0x30] sm:$0xff]
    %v496 = vld [vmem:[#allocation2 + $0x38] sm:$0xff]
    %v497 = vpack.c.bf16 %v494, %v494
    %v499 = vsel %vm260, %v497, 0
    %501 = vmatprep.subr.bf16.mxu0 %v245
    %502 = vmatpush1.bf16.msra.mxu0 %v244
    %503 = vmatprep.subr.bf16.mxu0 %v247
    %504 = vmatpush1.bf16.msra.mxu0 %v246
    %505 = vmatprep.subr.bf16.mxu0 %v249
    %506 = vmatpush1.bf16.msra.mxu0 %v248
    %507 = vmatprep.subr.bf16.mxu0 %v251
    %508 = vmatpush1.bf16.msra.mxu0 %v250
    %509 = vmatprep.subr.bf16.mxu0 0
    %510 = vmatpush1.bf16.msra.mxu0 0
    %511 = vmatprep.subr.bf16.mxu0 0
    %512 = vmatpush1.bf16.msra.mxu0 0
    %513 = vmatprep.subr.bf16.mxu0 0
    %514 = vmatpush1.bf16.msra.mxu0 0
    %515 = vmatprep.subr.bf16.mxu0 0
    %516 = vmatpush1.bf16.msra.mxu0 0
    %517 = vmatprep.subr.bf16.mxu0 0
    %518 = vmatpush1.bf16.msra.mxu0 0
    %519 = vmatprep.subr.bf16.mxu0 0
    %520 = vmatpush1.bf16.msra.mxu0 0
    %521 = vmatprep.subr.bf16.mxu0 0
    %522 = vmatpush1.bf16.msra.mxu0 0
    %523 = vmatprep.subr.bf16.mxu0 0
    %524 = vmatpush1.bf16.msra.mxu0 0
    %525 = vmatprep.subr.bf16.mxu0 0
    %526 = vmatpush1.bf16.msra.mxu0 0
    %527 = vmatprep.subr.bf16.mxu0 0
    %528 = vmatpush1.bf16.msra.mxu0 0
    %529 = vmatprep.subr.bf16.mxu0 0
    %530 = vmatpush1.bf16.msra.mxu0 0
    %531 = vmatprep.subr.bf16.mxu0 0
    %532 = vmatpush1.bf16.msra.mxu0 0
    %533 = vmatprep.mubr.bf16.mxu0 0
    %534 = vmatmul.mubr.bf16.gmra.mrb[0].mxu0 %v499
    %v535 = vpop.f32.mrb[0].mxu0
    %v536 = vadd.f32 0.0, %v535
    %v537 = vpop.f32.mrb[0].mxu0
    %v538 = vadd.f32 0.0, %v537
    %v539 = vpop.f32.mrb[0].mxu0
    %v540 = vpop.f32.mrb[0].mxu0
    %541 = vdwg.mxu0
    %v542 = vadd.f32 %v495, %v536
    %v543 = vadd.f32 %v496, %v538
    %v544 = vxor.u32 %v542, 2147483648
    %v545 = vxor.u32 %v543, 2147483648
    %v546 = vmul.f32 %v544, 1.442695
    %v547 = vpow.pop %v546
    %v548 = vmul.f32 %v545, 1.442695
    %v549 = vpow.pop %v548
    %v550 = vadd.f32 %v547, 1.0
    %v551 = vadd.f32 %v549, 1.0
    %v552 = vrcp.pop %v550
    %v553 = vmul.f32 1.0, %v552
    %v554 = vrcp.pop %v551
    %v555 = vmul.f32 1.0, %v554
    %v556 = vtanh.pop %v543
    %v557 = vmul.f32 %v553, %v488
    %559 = vrot.lane.b32.xlu0 %v556, 64
    %v560 = vpop.permute.xlu0 %559
    %v562 = vmul.f32 %v553, %v560
    %564 = vrot.lane.b32.xlu0 %v562, 64
    %v565 = vpop.permute.xlu0 %564
    %v567 = vadd.f32 %v557, %v565
    %v568 = vtanh.pop %v567
    %570 = vrot.lane.b32.xlu0 %v568, 64
    %v571 = vpop.permute.xlu0 %570
    %v573 = vmul.f32 %v555, %v571
    %v574 = vld [vmem:[#allocation2 + $0x40] sm:$0xff]
    %v575 = vld [vmem:[#allocation2 + $0x48] sm:$0xff]
    %v576 = vpack.c.bf16 %v573, %v573
    %v578 = vsel %vm260, %v576, 0
    %580 = vmatprep.subr.bf16.mxu0 %v245
    %581 = vmatpush1.bf16.msra.mxu0 %v244
    %582 = vmatprep.subr.bf16.mxu0 %v247
    %583 = vmatpush1.bf16.msra.mxu0 %v246
    %584 = vmatprep.subr.bf16.mxu0 %v249
    %585 = vmatpush1.bf16.msra.mxu0 %v248
    %586 = vmatprep.subr.bf16.mxu0 %v251
    %587 = vmatpush1.bf16.msra.mxu0 %v250
    %588 = vmatprep.subr.bf16.mxu0 0
    %589 = vmatpush1.bf16.msra.mxu0 0
    %590 = vmatprep.subr.bf16.mxu0 0
    %591 = vmatpush1.bf16.msra.mxu0 0
    %592 = vmatprep.subr.bf16.mxu0 0
    %593 = vmatpush1.bf16.msra.mxu0 0
    %594 = vmatprep.subr.bf16.mxu0 0
    %595 = vmatpush1.bf16.msra.mxu0 0
    %596 = vmatprep.subr.bf16.mxu0 0
    %597 = vmatpush1.bf16.msra.mxu0 0
    %598 = vmatprep.subr.bf16.mxu0 0
    %599 = vmatpush1.bf16.msra.mxu0 0
    %600 = vmatprep.subr.bf16.mxu0 0
    %601 = vmatpush1.bf16.msra.mxu0 0
    %602 = vmatprep.subr.bf16.mxu0 0
    %603 = vmatpush1.bf16.msra.mxu0 0
    %604 = vmatprep.subr.bf16.mxu0 0
    %605 = vmatpush1.bf16.msra.mxu0 0
    %606 = vmatprep.subr.bf16.mxu0 0
    %607 = vmatpush1.bf16.msra.mxu0 0
    %608 = vmatprep.subr.bf16.mxu0 0
    %609 = vmatpush1.bf16.msra.mxu0 0
    %610 = vmatprep.subr.bf16.mxu0 0
    %611 = vmatpush1.bf16.msra.mxu0 0
    %612 = vmatprep.mubr.bf16.mxu0 0
    %613 = vmatmul.mubr.bf16.gmra.mrb[0].mxu0 %v578
    %v614 = vpop.f32.mrb[0].mxu0
    %v615 = vadd.f32 0.0, %v614
    %v616 = vpop.f32.mrb[0].mxu0
    %v617 = vadd.f32 0.0, %v616
    %v618 = vpop.f32.mrb[0].mxu0
    %v619 = vpop.f32.mrb[0].mxu0
    %620 = vdwg.mxu0
    %v621 = vadd.f32 %v574, %v615
    %v622 = vadd.f32 %v575, %v617
    %v623 = vxor.u32 %v621, 2147483648
    %v624 = vxor.u32 %v622, 2147483648
    %v625 = vmul.f32 %v623, 1.442695
    %v626 = vpow.pop %v625
    %v627 = vmul.f32 %v624, 1.442695
    %v628 = vpow.pop %v627
    %v629 = vadd.f32 %v626, 1.0
    %v630 = vadd.f32 %v628, 1.0
    %v631 = vrcp.pop %v629
    %v632 = vmul.f32 1.0, %v631
    %v633 = vrcp.pop %v630
    %v634 = vmul.f32 1.0, %v633
    %v635 = vtanh.pop %v622
    %v636 = vmul.f32 %v632, %v567
    %638 = vrot.lane.b32.xlu0 %v635, 64
    %v639 = vpop.permute.xlu0 %638
    %v641 = vmul.f32 %v632, %v639
    %643 = vrot.lane.b32.xlu0 %v641, 64
    %v644 = vpop.permute.xlu0 %643
    %v646 = vadd.f32 %v636, %v644
    %v647 = vtanh.pop %v646
    %649 = vrot.lane.b32.xlu0 %v647, 64
    %v650 = vpop.permute.xlu0 %649
    %v652 = vmul.f32 %v634, %v650
    %v653 = vld [vmem:[#allocation2 + $0x50] sm:$0xff]
    %v654 = vld [vmem:[#allocation2 + $0x58] sm:$0xff]
    %v655 = vpack.c.bf16 %v652, %v652
    %v657 = vsel %vm260, %v655, 0
    %659 = vmatprep.subr.bf16.mxu0 %v245
    %660 = vmatpush1.bf16.msra.mxu0 %v244
    %661 = vmatprep.subr.bf16.mxu0 %v247
    %662 = vmatpush1.bf16.msra.mxu0 %v246
    %663 = vmatprep.subr.bf16.mxu0 %v249
    %664 = vmatpush1.bf16.msra.mxu0 %v248
    %665 = vmatprep.subr.bf16.mxu0 %v251
    %666 = vmatpush1.bf16.msra.mxu0 %v250
    %667 = vmatprep.subr.bf16.mxu0 0
    %668 = vmatpush1.bf16.msra.mxu0 0
    %669 = vmatprep.subr.bf16.mxu0 0
    %670 = vmatpush1.bf16.msra.mxu0 0
    %671 = vmatprep.subr.bf16.mxu0 0
    %672 = vmatpush1.bf16.msra.mxu0 0
    %673 = vmatprep.subr.bf16.mxu0 0
    %674 = vmatpush1.bf16.msra.mxu0 0
    %675 = vmatprep.subr.bf16.mxu0 0
    %676 = vmatpush1.bf16.msra.mxu0 0
    %677 = vmatprep.subr.bf16.mxu0 0
    %678 = vmatpush1.bf16.msra.mxu0 0
    %679 = vmatprep.subr.bf16.mxu0 0
    %680 = vmatpush1.bf16.msra.mxu0 0
    %681 = vmatprep.subr.bf16.mxu0 0
    %682 = vmatpush1.bf16.msra.mxu0 0
    %683 = vmatprep.subr.bf16.mxu0 0
    %684 = vmatpush1.bf16.msra.mxu0 0
    %685 = vmatprep.subr.bf16.mxu0 0
    %686 = vmatpush1.bf16.msra.mxu0 0
    %687 = vmatprep.subr.bf16.mxu0 0
    %688 = vmatpush1.bf16.msra.mxu0 0
    %689 = vmatprep.subr.bf16.mxu0 0
    %690 = vmatpush1.bf16.msra.mxu0 0
    %691 = vmatprep.mubr.bf16.mxu0 0
    %692 = vmatmul.mubr.bf16.gmra.mrb[0].mxu0 %v657
    %v693 = vpop.f32.mrb[0].mxu0
    %v694 = vadd.f32 0.0, %v693
    %v695 = vpop.f32.mrb[0].mxu0
    %v696 = vadd.f32 0.0, %v695
    %v697 = vpop.f32.mrb[0].mxu0
    %v698 = vpop.f32.mrb[0].mxu0
    %699 = vdwg.mxu0
    %v700 = vadd.f32 %v653, %v694
    %v701 = vadd.f32 %v654, %v696
    %v702 = vxor.u32 %v700, 2147483648
    %v703 = vxor.u32 %v701, 2147483648
    %v704 = vmul.f32 %v702, 1.442695
    %v705 = vpow.pop %v704
    %v706 = vmul.f32 %v703, 1.442695
    %v707 = vpow.pop %v706
    %v708 = vadd.f32 %v705, 1.0
    %v709 = vadd.f32 %v707, 1.0
    %v710 = vrcp.pop %v708
    %v711 = vmul.f32 1.0, %v710
    %v712 = vrcp.pop %v709
    %v713 = vmul.f32 1.0, %v712
    %v714 = vtanh.pop %v701
    %v715 = vmul.f32 %v711, %v646
    %717 = vrot.lane.b32.xlu0 %v714, 64
    %v718 = vpop.permute.xlu0 %717
    %v720 = vmul.f32 %v711, %v718
    %722 = vrot.lane.b32.xlu0 %v720, 64
    %v723 = vpop.permute.xlu0 %722
    %v725 = vadd.f32 %v715, %v723
    %v726 = vtanh.pop %v725
    %728 = vrot.lane.b32.xlu0 %v726, 64
    %v729 = vpop.permute.xlu0 %728
    %v731 = vmul.f32 %v713, %v729
    %v732 = vld [vmem:[#allocation2 + $0x60] sm:$0xff]
    %v733 = vld [vmem:[#allocation2 + $0x68] sm:$0xff]
    %v734 = vpack.c.bf16 %v731, %v731
    %v736 = vsel %vm260, %v734, 0
    %738 = vmatprep.subr.bf16.mxu0 %v245
    %739 = vmatpush1.bf16.msra.mxu0 %v244
    %740 = vmatprep.subr.bf16.mxu0 %v247
    %741 = vmatpush1.bf16.msra.mxu0 %v246
    %742 = vmatprep.subr.bf16.mxu0 %v249
    %743 = vmatpush1.bf16.msra.mxu0 %v248
    %744 = vmatprep.subr.bf16.mxu0 %v251
    %745 = vmatpush1.bf16.msra.mxu0 %v250
    %746 = vmatprep.subr.bf16.mxu0 0
    %747 = vmatpush1.bf16.msra.mxu0 0
    %748 = vmatprep.subr.bf16.mxu0 0
    %749 = vmatpush1.bf16.msra.mxu0 0
    %750 = vmatprep.subr.bf16.mxu0 0
    %751 = vmatpush1.bf16.msra.mxu0 0
    %752 = vmatprep.subr.bf16.mxu0 0
    %753 = vmatpush1.bf16.msra.mxu0 0
    %754 = vmatprep.subr.bf16.mxu0 0
    %755 = vmatpush1.bf16.msra.mxu0 0
    %756 = vmatprep.subr.bf16.mxu0 0
    %757 = vmatpush1.bf16.msra.mxu0 0
    %758 = vmatprep.subr.bf16.mxu0 0
    %759 = vmatpush1.bf16.msra.mxu0 0
    %760 = vmatprep.subr.bf16.mxu0 0
    %761 = vmatpush1.bf16.msra.mxu0 0
    %762 = vmatprep.subr.bf16.mxu0 0
    %763 = vmatpush1.bf16.msra.mxu0 0
    %764 = vmatprep.subr.bf16.mxu0 0
    %765 = vmatpush1.bf16.msra.mxu0 0
    %766 = vmatprep.subr.bf16.mxu0 0
    %767 = vmatpush1.bf16.msra.mxu0 0
    %768 = vmatprep.subr.bf16.mxu0 0
    %769 = vmatpush1.bf16.msra.mxu0 0
    %770 = vmatprep.mubr.bf16.mxu0 0
    %771 = vmatmul.mubr.bf16.gmra.mrb[0].mxu0 %v736
    %v772 = vpop.f32.mrb[0].mxu0
    %v773 = vadd.f32 0.0, %v772
    %v774 = vpop.f32.mrb[0].mxu0
    %v775 = vadd.f32 0.0, %v774
    %v776 = vpop.f32.mrb[0].mxu0
    %v777 = vpop.f32.mrb[0].mxu0
    %778 = vdwg.mxu0
    %v779 = vadd.f32 %v732, %v773
    %v780 = vadd.f32 %v733, %v775
    %v781 = vxor.u32 %v779, 2147483648
    %v782 = vxor.u32 %v780, 2147483648
    %v783 = vmul.f32 %v781, 1.442695
    %v784 = vpow.pop %v783
    %v785 = vmul.f32 %v782, 1.442695
    %v786 = vpow.pop %v785
    %v787 = vadd.f32 %v784, 1.0
    %v788 = vadd.f32 %v786, 1.0
    %v789 = vrcp.pop %v787
    %v790 = vmul.f32 1.0, %v789
    %v791 = vrcp.pop %v788
    %v792 = vmul.f32 1.0, %v791
    %v793 = vtanh.pop %v780
    %v794 = vmul.f32 %v790, %v725
    %796 = vrot.lane.b32.xlu0 %v793, 64
    %v797 = vpop.permute.xlu0 %796
    %v799 = vmul.f32 %v790, %v797
    %801 = vrot.lane.b32.xlu0 %v799, 64
    %v802 = vpop.permute.xlu0 %801
    %v804 = vadd.f32 %v794, %v802
    %v805 = vtanh.pop %v804
    %807 = vrot.lane.b32.xlu0 %v805, 64
    %v808 = vpop.permute.xlu0 %807
    %v810 = vmul.f32 %v792, %v808
    %v811 = vld [vmem:[#allocation2 + $0x70] sm:$0xff]
    %v812 = vld [vmem:[#allocation2 + $0x78] sm:$0xff]
    %v813 = vpack.c.bf16 %v810, %v810
    %v815 = vsel %vm260, %v813, 0
    %817 = vmatprep.subr.bf16.mxu0 %v245
    %818 = vmatpush1.bf16.msra.mxu0 %v244
    %819 = vmatprep.subr.bf16.mxu0 %v247
    %820 = vmatpush1.bf16.msra.mxu0 %v246
    %821 = vmatprep.subr.bf16.mxu0 %v249
    %822 = vmatpush1.bf16.msra.mxu0 %v248
    %823 = vmatprep.subr.bf16.mxu0 %v251
    %824 = vmatpush1.bf16.msra.mxu0 %v250
    %825 = vmatprep.subr.bf16.mxu0 0
    %826 = vmatpush1.bf16.msra.mxu0 0
    %827 = vmatprep.subr.bf16.mxu0 0
    %828 = vmatpush1.bf16.msra.mxu0 0
    %829 = vmatprep.subr.bf16.mxu0 0
    %830 = vmatpush1.bf16.msra.mxu0 0
    %831 = vmatprep.subr.bf16.mxu0 0
    %832 = vmatpush1.bf16.msra.mxu0 0
    %833 = vmatprep.subr.bf16.mxu0 0
    %834 = vmatpush1.bf16.msra.mxu0 0
    %835 = vmatprep.subr.bf16.mxu0 0
    %836 = vmatpush1.bf16.msra.mxu0 0
    %837 = vmatprep.subr.bf16.mxu0 0
    %838 = vmatpush1.bf16.msra.mxu0 0
    %839 = vmatprep.subr.bf16.mxu0 0
    %840 = vmatpush1.bf16.msra.mxu0 0
    %841 = vmatprep.subr.bf16.mxu0 0
    %842 = vmatpush1.bf16.msra.mxu0 0
    %843 = vmatprep.subr.bf16.mxu0 0
    %844 = vmatpush1.bf16.msra.mxu0 0
    %845 = vmatprep.subr.bf16.mxu0 0
    %846 = vmatpush1.bf16.msra.mxu0 0
    %847 = vmatprep.subr.bf16.mxu0 0
    %848 = vmatpush1.bf16.msra.mxu0 0
    %849 = vmatprep.mubr.bf16.mxu0 0
    %850 = vmatmul.mubr.bf16.gmra.mrb[0].mxu0 %v815
    %v851 = vpop.f32.mrb[0].mxu0
    %v852 = vadd.f32 0.0, %v851
    %v853 = vpop.f32.mrb[0].mxu0
    %v854 = vadd.f32 0.0, %v853
    %v855 = vpop.f32.mrb[0].mxu0
    %v856 = vpop.f32.mrb[0].mxu0
    %857 = vdwg.mxu0
    %v858 = vadd.f32 %v811, %v852
    %v859 = vadd.f32 %v812, %v854
    %v860 = vxor.u32 %v858, 2147483648
    %v861 = vxor.u32 %v859, 2147483648
    %v862 = vmul.f32 %v860, 1.442695
    %v863 = vpow.pop %v862
    %v864 = vmul.f32 %v861, 1.442695
    %v865 = vpow.pop %v864
    %v866 = vadd.f32 %v863, 1.0
    %v867 = vadd.f32 %v865, 1.0
    %v868 = vrcp.pop %v866
    %v869 = vmul.f32 1.0, %v868
    %v870 = vrcp.pop %v867
    %v871 = vmul.f32 1.0, %v870
    %v872 = vtanh.pop %v859
    %v873 = vmul.f32 %v869, %v804
    %875 = vrot.lane.b32.xlu0 %v872, 64
    %v876 = vpop.permute.xlu0 %875
    %v878 = vmul.f32 %v869, %v876
    %880 = vrot.lane.b32.xlu0 %v878, 64
    %v881 = vpop.permute.xlu0 %880
    %v883 = vadd.f32 %v873, %v881
    %v884 = vtanh.pop %v883
    %886 = vrot.lane.b32.xlu0 %v884, 64
    %v887 = vpop.permute.xlu0 %886
    %v889 = vmul.f32 %v871, %v887
    %v890 = vld [vmem:[#allocation3 + $0x10] sm:$0xff]
    %v891 = vld [vmem:[#allocation3 + $0x20] sm:$0xff]
    %v892 = vld [vmem:[#allocation3 + $0x30] sm:$0xff]
    %v893 = vld [vmem:[#allocation3 + $0x40] sm:$0xff]
    %v894 = vld [vmem:[#allocation3 + $0x50] sm:$0xff]
    %v895 = vld [vmem:[#allocation3 + $0x60] sm:$0xff]
    %v896 = vld [vmem:[#allocation3 + $0x70] sm:$0xff]
    %v897 = vld [vmem:[#allocation3 + $0x80] sm:$0xff]
    %v898 = vld [vmem:[#allocation3 + $0x90] ss:$0 sm:$0xff]
    %v899 = vld [vmem:[#allocation3 + $0xa0] ss:$0 sm:$0xff]
    %v900 = vld [vmem:[#allocation3 + $0xb0] ss:$0 sm:$0xff]
    %v902 = vsel %vm260, %v889, 0
    %904 = vmatprep.subr.mxu0 0.0
    %905 = vmatpush1.msra.mxu0 %v890
    %906 = vmatprep.subr.mxu0 0.0
    %907 = vmatpush1.msra.mxu0 %v891
    %908 = vmatprep.subr.mxu0 0.0
    %909 = vmatpush1.msra.mxu0 %v892
    %910 = vmatprep.subr.mxu0 0.0
    %911 = vmatpush1.msra.mxu0 %v893
    %912 = vmatprep.subr.mxu0 0.0
    %913 = vmatpush1.msra.mxu0 %v894
    %914 = vmatprep.subr.mxu0 0.0
    %915 = vmatpush1.msra.mxu0 %v895
    %916 = vmatprep.subr.mxu0 0.0
    %917 = vmatpush1.msra.mxu0 %v896
    %918 = vmatprep.subr.mxu0 0.0
    %919 = vmatpush1.msra.mxu0 %v897
    %920 = vmatprep.subr.mxu0 0.0
    %921 = vmatpush1.msra.mxu0 0.0
    %922 = vmatprep.subr.mxu0 0.0
    %923 = vmatpush1.msra.mxu0 0.0
    %924 = vmatprep.subr.mxu0 0.0
    %925 = vmatpush1.msra.mxu0 0.0
    %926 = vmatprep.subr.mxu0 0.0
    %927 = vmatpush1.msra.mxu0 0.0
    %928 = vmatprep.subr.mxu0 0.0
    %929 = vmatpush1.msra.mxu0 0.0
    %930 = vmatprep.subr.mxu0 0.0
    %931 = vmatpush1.msra.mxu0 0.0
    %932 = vmatprep.subr.mxu0 0.0
    %933 = vmatpush1.msra.mxu0 0.0
    %934 = vmatprep.subr.mxu0 0.0
    %935 = vmatpush1.msra.mxu0 0.0
    %936 = vmatprep.subr.mxu0 0.0
    %937 = vmatpush1.msra.mxu0 0.0
    %938 = vmatprep.subr.mxu0 0.0
    %939 = vmatpush1.msra.mxu0 0.0
    %940 = vmatprep.subr.mxu0 0.0
    %941 = vmatpush1.msra.mxu0 0.0
    %942 = vmatprep.subr.mxu0 0.0
    %943 = vmatpush1.msra.mxu0 0.0
    %944 = vmatprep.subr.mxu0 0.0
    %945 = vmatpush1.msra.mxu0 0.0
    %946 = vmatprep.subr.mxu0 0.0
    %947 = vmatpush1.msra.mxu0 0.0
    %948 = vmatprep.subr.mxu0 0.0
    %949 = vmatpush1.msra.mxu0 0.0
    %950 = vmatprep.subr.mxu0 0.0
    %951 = vmatpush1.msra.mxu0 0.0
    %952 = vmatprep.subr.mxu0 0.0
    %953 = vmatpush1.msra.mxu0 0.0
    %954 = vmatprep.subr.mxu0 0.0
    %955 = vmatpush1.msra.mxu0 0.0
    %956 = vmatprep.subr.mxu0 0.0
    %957 = vmatpush1.msra.mxu0 0.0
    %958 = vmatprep.subr.mxu0 0.0
    %959 = vmatpush1.msra.mxu0 0.0
    %960 = vmatprep.subr.mxu0 0.0
    %961 = vmatpush1.msra.mxu0 0.0
    %962 = vmatprep.subr.mxu0 0.0
    %963 = vmatpush1.msra.mxu0 0.0
    %964 = vmatprep.subr.mxu0 0.0
    %965 = vmatpush1.msra.mxu0 0.0
    %966 = vmatprep.subr.mxu0 0.0
    %967 = vmatpush1.msra.mxu0 0.0
    %968 = vmatprep.mubr.f32.mxu0 0.0
    %969 = vmatmul.mubr.f32.gmra.mrb[0].mxu0 %v902
    %v970 = vpop.f32.mrb[0].mxu0
    %v971 = vadd.f32 %v898, %v970
    %v972 = vpop.f32.mrb[0].mxu0
    %973 = vdwg.mxu0
    %v974 = vmax.f32 %v971, 0.0
    %v975 = vmul.f32 %v974, %v899
    %976 = vadd.xlane.f32.xlu0 %v975
    %v977 = vpop.xlane.xlu0 %976
    %v978 = vadd.f32 %v977, %v900
    %vm979 = vcmask 7168
    %980 = vst.msk [vmem:[%s4] sm:$0xff] %vm979, %v978
    // Predicated region
    $region22: #{model_simple_small_forward.1} parent=1 // pred_check
      _
    $region23: #{model_simple_small_forward.1} parent=1 // pred_check_branch
      %982 = sbr.rel (0) target = $region25
    $region24: #{model_simple_small_forward.1} parent=1 // pred_region
      _
    $region25: #{model_simple_small_forward.1} parent=1 // pred_fallthru
      _
    // Predicated region
    $region26: #{model_simple_small_forward.1} parent=1 // pred_check
      _
    $region27: #{model_simple_small_forward.1} parent=1 // pred_check_branch
      %984 = sbr.rel (0) target = $region29
    $region28: #{model_simple_small_forward.1} parent=1 // pred_region
      _
    $region29: #{model_simple_small_forward.1} parent=1 // pred_fallthru
      _
    %985 = vsyncpa [#allocation4], 1

</llo_original>
